<compile_context>
chip_gen: v5e
topology: v5e:2x2
jax: 0.10.0
libtpu: 0.0.40
codegen_flags: <defaults>
</compile_context>

<pallas_src>
import functools

import jax
import jax.numpy as jnp
from jax.experimental import pallas as pl
from jax.experimental.pallas import tpu as pltpu


def narx_forward(x, params, nx, ny, input_delay, feedback_delay, tm=512):
    """Narx forward pass (close_loop=False). x: (nt, ngrid, nx) float32."""
    nt, ngrid, nxf = x.shape
    assert nxf == nx
    max_delay = max(input_delay, feedback_delay)
    assert nt > max_delay
    nxm = nx - ny
    T = nt - max_delay
    M = T * ngrid
    hidden = params["w_in"].shape[1]

    # ---- regroup linearIn weights by time offset (absorbs the duplicated taps) ----
    # concat order of the PyTorch loop: last step first, then oldest -> newest.
    w_in = params["w_in"]                               # (in_features, hidden), feat @ w_in
    x_off = [-1] + list(range(-input_delay, 0))
    y_off = [-1] + list(range(-feedback_delay, 0))
    w_grp = jnp.zeros((max_delay, nx, hidden), w_in.dtype)
    for k, off in enumerate(x_off):
        d = max_delay + off
        w_grp = w_grp.at[d, :nxm, :].add(w_in[k * nxm:(k + 1) * nxm, :])
    y_base = (input_delay + 1) * nxm
    for j, off in enumerate(y_off):
        d = max_delay + off
        w_grp = w_grp.at[d, nxm:, :].add(w_in[y_base + j * ny:y_base + (j + 1) * ny, :])
    w_grp_t = jnp.transpose(w_grp, (0, 2, 1))           # (max_delay, hidden, nx)

    # transposed ("column-major" compute) copies of the remaining layers
    b_in_c = params["b_in"].reshape(hidden, 1)
    w_ih_c = params["w_ih"].T                           # (hidden, hidden)
    b_cell_c = params["b_cell"].reshape(hidden, 1)
    w_out_c = params["w_out"].T                         # (ny, hidden)
    b_out_c = params["b_out"].reshape(ny, 1)

    # ---- lane-major layout of x: the flattened time*basin axis sits on lanes ----
    m128 = -(-M // 128) * 128
    tile = max(128, min(-(-tm // 128) * 128, m128))     # multiple of 128, <= padded M
    grid_n = -(-M // tile)
    window = tile + max_delay * ngrid                   # x columns needed per grid step
    n_cols = grid_n * tile + max_delay * ngrid
    x_t = jnp.transpose(x.reshape(nt * ngrid, nx))      # (nx, nt*ngrid) -- one copy of x
    x_t = jnp.pad(x_t, ((0, 0), (0, n_cols - nt * ngrid)))

    def kernel(x_hbm, wg_ref, b_in_ref, w_ih_ref, b_cell_ref, w_out_ref, b_out_ref,
               o_ref, xwin_ref, dma_sem):
        i = pl.program_id(0)
        col0 = pl.multiple_of(i * tile, 128)
        # fetch the overlapping x window [col0, col0 + window) straight from HBM
        cp = pltpu.make_async_copy(x_hbm.at[:, pl.ds(col0, window)], xwin_ref, dma_sem)
        cp.start()
        cp.wait()
        # linearIn as a sum over time-grouped taps (static, unrolled loop)
        acc = jnp.zeros((hidden, tile), jnp.float32)
        for d in range(max_delay):
            tap = xwin_ref[:, d * ngrid:d * ngrid + tile]            # (nx, tile)
            acc = acc + jnp.dot(wg_ref[d], tap, preferred_element_type=jnp.float32)
        h1 = jnp.maximum(acc + b_in_ref[...], 0.0)                   # relu(linearIn(xt))
        h2 = jnp.tanh(jnp.dot(w_ih_ref[...], h1,
                              preferred_element_type=jnp.float32) + b_cell_ref[...])  # RNNCell, hx=0
        y = jnp.dot(w_out_ref[...], h2, preferred_element_type=jnp.float32) + b_out_ref[...]
        o_ref[...] = y.astype(o_ref.dtype)                           # lane-dense (ny, tile) store

    flops = 2 * M * (max_delay * nx * hidden + hidden * hidden + hidden * ny)
    bytes_accessed = 4 * (x_t.size + w_grp_t.size + w_ih_c.size + w_out_c.size
                          + 2 * hidden + ny + grid_n * tile * ny)

    out_t = pl.pallas_call(
        kernel,
        out_shape=jax.ShapeDtypeStruct((ny, grid_n * tile), jnp.float32),
        grid_spec=pltpu.PrefetchScalarGridSpec(
            num_scalar_prefetch=0,
            grid=(grid_n,),
            in_specs=[
                pl.BlockSpec(memory_space=pl.ANY),                          # x stays in HBM
                pl.BlockSpec((max_delay, hidden, nx), lambda i: (0, 0, 0)),  # grouped W_in (transposed)
                pl.BlockSpec((hidden, 1), lambda i: (0, 0)),                # b_in
                pl.BlockSpec((hidden, hidden), lambda i: (0, 0)),           # W_ih
                pl.BlockSpec((hidden, 1), lambda i: (0, 0)),                # b_ih + b_hh
                pl.BlockSpec((ny, hidden), lambda i: (0, 0)),               # W_out
                pl.BlockSpec((ny, 1), lambda i: (0, 0)),                    # b_out
            ],
            out_specs=pl.BlockSpec((ny, tile), lambda i: (0, i)),
            scratch_shapes=[
                pltpu.VMEM((nx, window), jnp.float32),   # overlapping x window (tiny; no vmem_limit needed)
                pltpu.SemaphoreType.DMA,
            ],
        ),
        compiler_params=pltpu.CompilerParams(dimension_semantics=("parallel",)),
        cost_estimate=pl.CostEstimate(flops=flops, transcendentals=M * hidden,
                                      bytes_accessed=bytes_accessed),
    )(x_t, w_grp_t, b_in_c, w_ih_c, b_cell_c, w_out_c, b_out_c)

    yt = out_t[:, :M].T.reshape(T, ngrid, ny)
    # out[t] = x[t, :, -ny:] for the first max_delay steps
    return jnp.concatenate([x[:max_delay, :, nxm:], yt], axis=0)


def narx_forward_ref(x, params, nx, ny, input_delay, feedback_delay):
    """Pure-JAX reference transcribed verbatim from the PyTorch forward loop."""
    nt, ngrid, _ = x.shape
    max_delay = max(input_delay, feedback_delay)
    outs = [x[t, :, nx - ny:] for t in range(max_delay)]
    for t in range(max_delay, nt):
        x0 = x[t - input_delay:t, :, :nx - ny]
        x0_t = x0[-1]
        for i in range(input_delay):
            x0_t = jnp.concatenate([x0_t, x0[i]], axis=-1)
        y0 = x[t - feedback_delay:t, :, nx - ny:]
        y0_t = y0[-1]
        for i in range(feedback_delay):
            y0_t = jnp.concatenate([y0_t, y0[i]], axis=-1)
        xt = jnp.concatenate([x0_t, y0_t], axis=-1)
        xl = jnp.maximum(xt @ params["w_in"] + params["b_in"], 0.0)
        ht = jnp.tanh(xl @ params["w_ih"] + params["b_cell"])
        yt = ht @ params["w_out"] + params["b_out"]
        outs.append(yt)
    return jnp.stack(outs, axis=0)


if __name__ == "__main__":
    # Module hyper-parameters (small, consistent with Narx.__init__)
    nt, ngrid = 16, 8          # sequence length, number of basins (batch)
    nx, ny = 6, 2              # n_input_features, n_output_features
    hidden = 32                # n_hidden_states
    input_delay, feedback_delay = 3, 2
    in_features = (nx - ny) * (input_delay + 1) + ny * (feedback_delay + 1)

    key = jax.random.PRNGKey(0)
    keys = jax.random.split(key, 8)

    def uinit(k, shape, fan):
        bound = 1.0 / jnp.sqrt(jnp.float32(fan))
        return jax.random.uniform(k, shape, jnp.float32, -bound, bound)

    # Deterministic parameter init (PyTorch-default-style uniform), stored pre-transposed
    # in "feat @ W" orientation; narx_forward re-lays them out for the transposed kernel.
    w_in = uinit(keys[0], (in_features, hidden), in_features)   # linearIn.weight^T
    b_in = uinit(keys[1], (1, hidden), in_features)             # linearIn.bias
    w_ih = uinit(keys[2], (hidden, hidden), hidden)             # narx.weight_ih^T
    b_ih = uinit(keys[3], (1, hidden), hidden)                  # narx.bias_ih
    b_hh = uinit(keys[4], (1, hidden), hidden)                  # narx.bias_hh
    w_out = uinit(keys[5], (hidden, ny), hidden)                # linearOut.weight^T
    b_out = uinit(keys[6], (1, ny), hidden)                     # linearOut.bias
    params = dict(w_in=w_in, b_in=b_in, w_ih=w_ih,
                  b_cell=b_ih + b_hh,                            # W_hh @ 0 drops out; biases fold
                  w_out=w_out, b_out=b_out)

    x = jax.random.normal(keys[7], (nt, ngrid, nx), jnp.float32)

    fwd = jax.jit(functools.partial(narx_forward, nx=nx, ny=ny,
                                    input_delay=input_delay,
                                    feedback_delay=feedback_delay))
    out = jax.block_until_ready(fwd(x, params))

    ref = narx_forward_ref(x, params, nx, ny, input_delay, feedback_delay)
    assert out.shape == (nt, ngrid, ny)
    assert jnp.allclose(out, ref, atol=1e-4, rtol=1e-4), "mismatch vs reference"

    print("KERNEL_OK")
</pallas_src>

<mosaic_0001>
module attributes {stable_mosaic.version = 11 : i64} {
  func.func @kernel(%arg0: i32, %arg1: memref<6x152xf32, #tpu.memory_space<any>>, %arg2: memref<3x32x6xf32, #tpu.memory_space<vmem>>, %arg3: memref<32x1xf32, #tpu.memory_space<vmem>>, %arg4: memref<32x32xf32, #tpu.memory_space<vmem>>, %arg5: memref<32x1xf32, #tpu.memory_space<vmem>>, %arg6: memref<2x32xf32, #tpu.memory_space<vmem>>, %arg7: memref<2x1xf32, #tpu.memory_space<vmem>>, %arg8: memref<2x128xf32, #tpu.memory_space<vmem>>, %arg9: memref<6x152xf32, #tpu.memory_space<vmem>>, %arg10: memref<!tpu.dma_semaphore, #tpu.memory_space<semaphore_mem>>) attributes {dimension_semantics = [#tpu.dimension_semantics<parallel>], iteration_bounds = array<i64: 1>, scalar_prefetch = 0 : i64, scratch_operands = 2 : i64, tpu.core_type = #tpu.core_type<tc>, window_params = [{}, {pipeline_mode = #tpu.pipeline_mode<synchronous>, transform_indices = @transform_1, window_bounds = array<i64: 3, 32, 6>}, {pipeline_mode = #tpu.pipeline_mode<synchronous>, transform_indices = @transform_2, window_bounds = array<i64: 32, 1>}, {pipeline_mode = #tpu.pipeline_mode<synchronous>, transform_indices = @transform_3, window_bounds = array<i64: 32, 32>}, {pipeline_mode = #tpu.pipeline_mode<synchronous>, transform_indices = @transform_4, window_bounds = array<i64: 32, 1>}, {pipeline_mode = #tpu.pipeline_mode<synchronous>, transform_indices = @transform_5, window_bounds = array<i64: 2, 32>}, {pipeline_mode = #tpu.pipeline_mode<synchronous>, transform_indices = @transform_6, window_bounds = array<i64: 2, 1>}, {transform_indices = @transform_7, window_bounds = array<i64: 2, 128>}]} {
    %c128_i32 = arith.constant 128 : i32
    %0 = arith.muli %arg0, %c128_i32 : i32
    %1 = tpu.assume_multiple %0, 128 : i32
    %c0_i32 = arith.constant 0 : i32
    %2 = tpu.memref_slice %arg1[%c0_i32, %1] : memref<6x152xf32, #tpu.memory_space<any>> -> memref<6x152xf32, #tpu.memory_space<any>>
    tpu.enqueue_dma source(%2 : memref<6x152xf32, #tpu.memory_space<any>>) target(%arg9 : memref<6x152xf32, #tpu.memory_space<vmem>>) target_semaphore(%arg10 : memref<!tpu.dma_semaphore, #tpu.memory_space<semaphore_mem>>)
    %c0_i32_0 = arith.constant 0 : i32
    %3 = tpu.memref_slice %arg1[%c0_i32_0, %1] : memref<6x152xf32, #tpu.memory_space<any>> -> memref<6x152xf32, #tpu.memory_space<any>>
    tpu.wait_dma2 semaphore(%arg10 : memref<!tpu.dma_semaphore, #tpu.memory_space<semaphore_mem>>) src(%3 : memref<6x152xf32, #tpu.memory_space<any>>) dst(%arg9 : memref<6x152xf32, #tpu.memory_space<vmem>>)
    %cst = arith.constant 0.000000e+00 : f32
    %4 = vector.broadcast %cst : f32 to vector<32x128xf32>
    %c0 = arith.constant 0 : index
    %c0_1 = arith.constant 0 : index
    %5 = vector.load %arg9[%c0, %c0_1] : memref<6x152xf32, #tpu.memory_space<vmem>>, vector<6x128xf32>
    %c0_2 = arith.constant 0 : index
    %c0_3 = arith.constant 0 : index
    %c0_4 = arith.constant 0 : index
    %6 = vector.load %arg2[%c0_2, %c0_3, %c0_4] : memref<3x32x6xf32, #tpu.memory_space<vmem>>, vector<1x32x6xf32>
    %7 = vector.shape_cast %6 : vector<1x32x6xf32> to vector<32x6xf32>
    %cst_5 = arith.constant dense<0.000000e+00> : vector<32x128xf32>
    %8 = tpu.matmul %7, %5, %cst_5 {dimension_numbers = #tpu.dot_dimension_numbers<[1], [0], [0], [1], [0, 0, 1, 1], [], []>} : vector<32x6xf32>, vector<6x128xf32>, vector<32x128xf32> -> vector<32x128xf32>
    %9 = arith.addf %4, %8 : vector<32x128xf32>
    %c0_6 = arith.constant 0 : index
    %c8 = arith.constant 8 : index
    %10 = vector.load %arg9[%c0_6, %c8] : memref<6x152xf32, #tpu.memory_space<vmem>>, vector<6x128xf32>
    %c1 = arith.constant 1 : index
    %c0_7 = arith.constant 0 : index
    %c0_8 = arith.constant 0 : index
    %11 = vector.load %arg2[%c1, %c0_7, %c0_8] : memref<3x32x6xf32, #tpu.memory_space<vmem>>, vector<1x32x6xf32>
    %12 = vector.shape_cast %11 : vector<1x32x6xf32> to vector<32x6xf32>
    %cst_9 = arith.constant dense<0.000000e+00> : vector<32x128xf32>
    %13 = tpu.matmul %12, %10, %cst_9 {dimension_numbers = #tpu.dot_dimension_numbers<[1], [0], [0], [1], [0, 0, 1, 1], [], []>} : vector<32x6xf32>, vector<6x128xf32>, vector<32x128xf32> -> vector<32x128xf32>
    %14 = arith.addf %9, %13 : vector<32x128xf32>
    %c0_10 = arith.constant 0 : index
    %c16 = arith.constant 16 : index
    %15 = vector.load %arg9[%c0_10, %c16] : memref<6x152xf32, #tpu.memory_space<vmem>>, vector<6x128xf32>
    %c2 = arith.constant 2 : index
    %c0_11 = arith.constant 0 : index
    %c0_12 = arith.constant 0 : index
    %16 = vector.load %arg2[%c2, %c0_11, %c0_12] : memref<3x32x6xf32, #tpu.memory_space<vmem>>, vector<1x32x6xf32>
    %17 = vector.shape_cast %16 : vector<1x32x6xf32> to vector<32x6xf32>
    %cst_13 = arith.constant dense<0.000000e+00> : vector<32x128xf32>
    %18 = tpu.matmul %17, %15, %cst_13 {dimension_numbers = #tpu.dot_dimension_numbers<[1], [0], [0], [1], [0, 0, 1, 1], [], []>} : vector<32x6xf32>, vector<6x128xf32>, vector<32x128xf32> -> vector<32x128xf32>
    %19 = arith.addf %14, %18 : vector<32x128xf32>
    %c0_14 = arith.constant 0 : index
    %c0_15 = arith.constant 0 : index
    %20 = vector.load %arg3[%c0_14, %c0_15] : memref<32x1xf32, #tpu.memory_space<vmem>>, vector<32x1xf32>
    %21 = vector.broadcast %20 : vector<32x1xf32> to vector<32x128xf32>
    %22 = arith.addf %19, %21 : vector<32x128xf32>
    %cst_16 = arith.constant 0.000000e+00 : f32
    %23 = vector.broadcast %cst_16 : f32 to vector<32x128xf32>
    %24 = arith.maximumf %22, %23 : vector<32x128xf32>
    %c0_17 = arith.constant 0 : index
    %c0_18 = arith.constant 0 : index
    %25 = vector.load %arg4[%c0_17, %c0_18] : memref<32x32xf32, #tpu.memory_space<vmem>>, vector<32x32xf32>
    %cst_19 = arith.constant dense<0.000000e+00> : vector<32x128xf32>
    %26 = tpu.matmul %25, %24, %cst_19 {dimension_numbers = #tpu.dot_dimension_numbers<[1], [0], [0], [1], [0, 0, 1, 1], [], []>} : vector<32x32xf32>, vector<32x128xf32>, vector<32x128xf32> -> vector<32x128xf32>
    %c0_20 = arith.constant 0 : index
    %c0_21 = arith.constant 0 : index
    %27 = vector.load %arg5[%c0_20, %c0_21] : memref<32x1xf32, #tpu.memory_space<vmem>>, vector<32x1xf32>
    %28 = vector.broadcast %27 : vector<32x1xf32> to vector<32x128xf32>
    %29 = arith.addf %26, %28 : vector<32x128xf32>
    %30 = math.tanh %29 : vector<32x128xf32>
    %c0_22 = arith.constant 0 : index
    %c0_23 = arith.constant 0 : index
    %31 = vector.load %arg6[%c0_22, %c0_23] : memref<2x32xf32, #tpu.memory_space<vmem>>, vector<2x32xf32>
    %cst_24 = arith.constant dense<0.000000e+00> : vector<2x128xf32>
    %32 = tpu.matmul %31, %30, %cst_24 {dimension_numbers = #tpu.dot_dimension_numbers<[1], [0], [0], [1], [0, 0, 1, 1], [], []>} : vector<2x32xf32>, vector<32x128xf32>, vector<2x128xf32> -> vector<2x128xf32>
    %c0_25 = arith.constant 0 : index
    %c0_26 = arith.constant 0 : index
    %33 = vector.load %arg7[%c0_25, %c0_26] : memref<2x1xf32, #tpu.memory_space<vmem>>, vector<2x1xf32>
    %34 = vector.broadcast %33 : vector<2x1xf32> to vector<2x128xf32>
    %35 = arith.addf %32, %34 : vector<2x128xf32>
    %c0_27 = arith.constant 0 : index
    %c0_28 = arith.constant 0 : index
    %36 = vector.load %arg8[%c0_27, %c0_28] : memref<2x128xf32, #tpu.memory_space<vmem>>, vector<2x128xf32>
    tpu.vector_store %arg8[%c0_27, %c0_28], %35 {strides = array<i32>} : memref<2x128xf32, #tpu.memory_space<vmem>>, vector<2x128xf32>,
    return
  }
  func.func @transform_1(%arg0: i32) -> (i32, i32, i32) {
    %c0_i32 = arith.constant 0 : i32
    %c0_i32_0 = arith.constant 0 : i32
    %c0_i32_1 = arith.constant 0 : i32
    %c0_i32_2 = arith.constant 0 : i32
    return %c0_i32, %c0_i32_0, %c0_i32_1 : i32, i32, i32
  }
  func.func @transform_2(%arg0: i32) -> (i32, i32) {
    %c0_i32 = arith.constant 0 : i32
    %c0_i32_0 = arith.constant 0 : i32
    %c0_i32_1 = arith.constant 0 : i32
    return %c0_i32, %c0_i32_0 : i32, i32
  }
  func.func @transform_3(%arg0: i32) -> (i32, i32) {
    %c0_i32 = arith.constant 0 : i32
    %c0_i32_0 = arith.constant 0 : i32
    %c0_i32_1 = arith.constant 0 : i32
    return %c0_i32, %c0_i32_0 : i32, i32
  }
  func.func @transform_4(%arg0: i32) -> (i32, i32) {
    %c0_i32 = arith.constant 0 : i32
    %c0_i32_0 = arith.constant 0 : i32
    %c0_i32_1 = arith.constant 0 : i32
    return %c0_i32, %c0_i32_0 : i32, i32
  }
  func.func @transform_5(%arg0: i32) -> (i32, i32) {
    %c0_i32 = arith.constant 0 : i32
    %c0_i32_0 = arith.constant 0 : i32
    %c0_i32_1 = arith.constant 0 : i32
    return %c0_i32, %c0_i32_0 : i32, i32
  }
  func.func @transform_6(%arg0: i32) -> (i32, i32) {
    %c0_i32 = arith.constant 0 : i32
    %c0_i32_0 = arith.constant 0 : i32
    %c0_i32_1 = arith.constant 0 : i32
    return %c0_i32, %c0_i32_0 : i32, i32
  }
  func.func @transform_7(%arg0: i32) -> (i32, i32) {
    %c0_i32 = arith.constant 0 : i32
    %c0_i32_0 = arith.constant 0 : i32
    return %c0_i32, %arg0 : i32, i32
  }
}

</mosaic_0001>

<llo_original>
// kernel: narx_forward.1
$region0: #{narx_forward.1}
  #allocation0 [shape = 'u32[]', space=smem, size = 0x4, offset = 0x4, fixed_abs, tag = 'smem constant byte address 0x4 - core index']
  #allocation1 [shape = 'u32[72,128]{1,0:T(1,128)}', space=vmem, size = 0x9000, scoped, tag = 'internal scratch']
  #allocation2 [shape = 'f32[6,152]{1,0:T(8,128)}', space=vmem, size = 0x2000, scoped, tag = 'scratch operand']
  #allocation3 [shape = 's32[1]{0}', space=sflag, size = 0x4, scoped, tag = 'scratch operand']
  #allocation4 [shape = 's32[]', space=sflag, size = 0x4, offset = 0, fixed_abs, tag = 'sflag constant byte address 0x0 - dummy sync flag']
  %s0 = inlined_call_operand.vmem [shape: f32[6,152], index: 0, kind: input, shape index: {}]
  %s1 = inlined_call_operand.vmem [shape: f32[3,32,6], index: 1, kind: input, shape index: {}]
  %s2 = inlined_call_operand.vmem [shape: f32[32,1], index: 2, kind: input, shape index: {}]
  %s3 = inlined_call_operand.vmem [shape: f32[32,32], index: 3, kind: input, shape index: {}]
  %s4 = inlined_call_operand.vmem [shape: f32[32,1], index: 4, kind: input, shape index: {}]
  %s5 = inlined_call_operand.vmem [shape: f32[2,32], index: 5, kind: input, shape index: {}]
  %s6 = inlined_call_operand.vmem [shape: f32[2,1], index: 6, kind: input, shape index: {}]
  %s7 = inlined_call_operand.vmem [shape: f32[2,128], index: 7, kind: output, shape index: {}]
  %s8 = sld [smem:[#allocation0]]
  $region53: #{narx_forward.1} parent=0
    _
  %s10 = ssub.s32 1, %s8
  %s11 = scalar_select 0, %s10, %s8
  // Predicated region
  $region2: #{narx_forward.1} parent=0 // pred_check
    _
  $region3: #{narx_forward.1} parent=0 // pred_check_branch
    %13 = sbr.rel (0) target = $region5
  $region4: #{narx_forward.1} parent=0 // pred_region
    _
  $region5: #{narx_forward.1} parent=0 // pred_fallthru
    _
  // Predicated region
  $region6: #{narx_forward.1} parent=0 // pred_check
    _
  $region7: #{narx_forward.1} parent=0 // pred_check_branch
    %15 = sbr.rel (0) target = $region9
  $region8: #{narx_forward.1} parent=0 // pred_region
    _
  $region9: #{narx_forward.1} parent=0 // pred_fallthru
    _
  // Predicated region
  $region10: #{narx_forward.1} parent=0 // pred_check
    _
  $region11: #{narx_forward.1} parent=0 // pred_check_branch
    %17 = sbr.rel (0) target = $region13
  $region12: #{narx_forward.1} parent=0 // pred_region
    _
  $region13: #{narx_forward.1} parent=0 // pred_fallthru
    _
  // Predicated region
  $region14: #{narx_forward.1} parent=0 // pred_check
    _
  $region15: #{narx_forward.1} parent=0 // pred_check_branch
    %19 = sbr.rel (0) target = $region17
  $region16: #{narx_forward.1} parent=0 // pred_region
    _
  $region17: #{narx_forward.1} parent=0 // pred_fallthru
    _
  // Predicated region
  $region18: #{narx_forward.1} parent=0 // pred_check
    _
  $region19: #{narx_forward.1} parent=0 // pred_check_branch
    %21 = sbr.rel (0) target = $region21
  $region20: #{narx_forward.1} parent=0 // pred_region
    _
  $region21: #{narx_forward.1} parent=0 // pred_fallthru
    _
  // Predicated region
  $region22: #{narx_forward.1} parent=0 // pred_check
    _
  $region23: #{narx_forward.1} parent=0 // pred_check_branch
    %23 = sbr.rel (0) target = $region25
  $region24: #{narx_forward.1} parent=0 // pred_region
    _
  $region25: #{narx_forward.1} parent=0 // pred_fallthru
    _
  %s24 = smul.u32 0, 128
  %s25 = sshra.s32 %s24, 7
  %s26 = sand.u32 %s24, 127
  %s27 = smul.addr %s25, 8
  %s28 = scalar_lea.vmem %s0, %s27
  // Predicated region
  $region26: #{narx_forward.1} parent=0 // pred_check
    _
  $region27: #{narx_forward.1} parent=0 // pred_check_branch
    %30 = sbr.rel (0) target = $region29
  $region28: #{narx_forward.1} parent=0 // pred_region
    loop: start=0, step=1, limit=1
    $region30: #{narx_forward.1} parent=28 // loop_pre_header
      _
    $region31: #{narx_forward.1} parent=28 // loop_header
      %s32 = sphi 0, %s36
      %p33 = scmp.ge.s32.totalorder %s32, 1
      %s37 = sphi %s28, %s28
      %s38 = sphi [#allocation2], [#allocation2]
    $region32: #{narx_forward.1} parent=28 // loop_header_branch
      %35 = sbr.rel (%p33) target = $region36
    $region33: #{narx_forward.1} parent=28 // loop_body
      %v39 = vld [vmem:[%s37] sm:$0xff]
      %40 = vst [vmem:[%s38] sm:$0xff] %v39
      %v41 = vld [vmem:[%s37 + $0x8] sm:$0xff]
      %42 = vst [vmem:[%s38 + $0x8] sm:$0xff] %v41
    $region34: #{narx_forward.1} parent=28 // loop_footer
      %s36 = sadd.s32 1, %s32
    $region35: #{narx_forward.1} parent=28 // loop_footer_branch
      %31 = sbr.rel target = $region31
    $region36: #{narx_forward.1} parent=28 // loop_exit
      _
  $region29: #{narx_forward.1} parent=0 // pred_fallthru
    _
  // Predicated region
  $region37: #{narx_forward.1} parent=0 // pred_check
    _
  $region38: #{narx_forward.1} parent=0 // pred_check_branch
    %44 = sbr.rel target = $region40
  $region39: #{narx_forward.1} parent=0 // pred_region
    _
  $region40: #{narx_forward.1} parent=0 // pred_fallthru
    _
  // Predicated region
  $region41: #{narx_forward.1} parent=0 // pred_check
    _
  $region42: #{narx_forward.1} parent=0 // pred_check_branch
    %47 = sbr.rel (0) target = $region44
  $region43: #{narx_forward.1} parent=0 // pred_region
    %48 = vsyncadd [#allocation3], 256
  $region44: #{narx_forward.1} parent=0 // pred_fallthru
    _
  %s49 = smul.u32 8, 1
  %s50 = smul.u32 %s49, 2
  %s51 = sshll.u32 %s50, 4
  %52 = dma.done [#allocation3], %s51
  %v53 = vld [vmem:[#allocation2] sm:$0x3f]
  %v54 = vld [vmem:[%s1] sm:$0xff]
  %v55 = vld [vmem:[%s1 + $0x8] sm:$0xff]
  %v56 = vld [vmem:[%s1 + $0x10] sm:$0xff]
  %v57 = vld [vmem:[%s1 + $0x18] sm:$0xff]
  %v58 = vld [vmem:[#allocation2 + $0x8] sm:$0x3f]
  %s59 = scalar_lea.vmem %s1, 32
  %v60 = vld [vmem:[%s59] sm:$0xff]
  %v61 = vld [vmem:[%s59 + $0x8] sm:$0xff]
  %v62 = vld [vmem:[%s59 + $0x10] sm:$0xff]
  %v63 = vld [vmem:[%s59 + $0x18] sm:$0xff]
  %66 = vrot.lane.b32.xlu0 %v53, 120
  %v67 = vpop.permute.xlu0 %66
  %68 = vrot.lane.b32.xlu0 %v58, 120
  %v69 = vpop.permute.xlu0 %68
  %vm70 = vcmask 982016
  %v71 = vsel %vm70, %v67, %v69
  %vm72 = vcmask 48128
  %v74 = vsel %vm72, %v60, 0
  %v77 = vsel %vm72, %v61, 0
  %v80 = vsel %vm72, %v62, 0
  %v83 = vsel %vm72, %v63, 0
  %vm85 = vcmask 1045504
  %v86 = vsel %vm85, %v71, 0
  %88 = vmatpush.msra.mxu0 0.0
  %89 = vmatpush.msra.mxu0 0.0
  %90 = vmatpush.msra.mxu0 0.0
  %91 = vmatpush.msra.mxu0 0.0
  %92 = vmatpush.msra.mxu0 0.0
  %93 = vmatpush.msra.mxu0 0.0
  %94 = vmatpush.msra.mxu0 0.0
  %95 = vmatpush.msra.mxu0 0.0
  %96 = vmatpush.msra.mxu0 0.0
  %97 = vmatpush.msra.mxu0 0.0
  %98 = vmatpush.msra.mxu0 0.0
  %99 = vmatpush.msra.mxu0 0.0
  %100 = vmatpush.msra.mxu0 0.0
  %101 = vmatpush.msra.mxu0 0.0
  %102 = vmatpush.msra.mxu0 0.0
  %103 = vmatpush.msra.mxu0 %v86
  %104 = vmatmul.f32.gmra.mxu0 %v74
  %v105 = vpop.f32.mrf.mxu0
  %v106 = vadd.f32 0.0, %v105
  %107 = vmatmul.f32.gmra.mxu0 %v77
  %v108 = vpop.f32.mrf.mxu0
  %v109 = vadd.f32 0.0, %v108
  %110 = vmatmul.f32.gmra.mxu0 %v80
  %v111 = vpop.f32.mrf.mxu0
  %v112 = vadd.f32 0.0, %v111
  %113 = vmatmul.f32.gmra.mxu0 %v83
  %v114 = vpop.f32.mrf.mxu0
  %v115 = vadd.f32 0.0, %v114
  %116 = vdwg.mxu0
  %v118 = vsel %vm72, %v54, 0
  %v121 = vsel %vm72, %v55, 0
  %v124 = vsel %vm72, %v56, 0
  %v127 = vsel %vm72, %v57, 0
  %v129 = vsel %vm85, %v53, 0
  %131 = vmatpush.msra.mxu0 0.0
  %132 = vmatpush.msra.mxu0 0.0
  %133 = vmatpush.msra.mxu0 0.0
  %134 = vmatpush.msra.mxu0 0.0
  %135 = vmatpush.msra.mxu0 0.0
  %136 = vmatpush.msra.mxu0 0.0
  %137 = vmatpush.msra.mxu0 0.0
  %138 = vmatpush.msra.mxu0 0.0
  %139 = vmatpush.msra.mxu0 0.0
  %140 = vmatpush.msra.mxu0 0.0
  %141 = vmatpush.msra.mxu0 0.0
  %142 = vmatpush.msra.mxu0 0.0
  %143 = vmatpush.msra.mxu0 0.0
  %144 = vmatpush.msra.mxu0 0.0
  %145 = vmatpush.msra.mxu0 0.0
  %146 = vmatpush.msra.mxu0 %v129
  %147 = vmatmul.f32.gmra.mxu0 %v118
  %v148 = vpop.f32.mrf.mxu0
  %v149 = vadd.f32 %v106, %v148
  %150 = vmatmul.f32.gmra.mxu0 %v121
  %v151 = vpop.f32.mrf.mxu0
  %v152 = vadd.f32 %v109, %v151
  %153 = vmatmul.f32.gmra.mxu0 %v124
  %v154 = vpop.f32.mrf.mxu0
  %v155 = vadd.f32 %v112, %v154
  %156 = vmatmul.f32.gmra.mxu0 %v127
  %v157 = vpop.f32.mrf.mxu0
  %v158 = vadd.f32 %v115, %v157
  %159 = vdwg.mxu0
  %s160 = scalar_lea.vmem %s1, 64
  %v161 = vld [vmem:[%s160] sm:$0xff]
  %v162 = vld [vmem:[%s160 + $0x8] sm:$0xff]
  %v163 = vld [vmem:[%s160 + $0x10] sm:$0xff]
  %v164 = vld [vmem:[%s160 + $0x18] sm:$0xff]
  %165 = vrot.lane.b32.xlu0 %v53, 112
  %v166 = vpop.permute.xlu0 %165
  %167 = vrot.lane.b32.xlu0 %v58, 112
  %v168 = vpop.permute.xlu0 %167
  %vm169 = vcmask 916480
  %v170 = vsel %vm169, %v166, %v168
  %v172 = vsel %vm72, %v161, 0
  %v175 = vsel %vm72, %v162, 0
  %v178 = vsel %vm72, %v163, 0
  %v181 = vsel %vm72, %v164, 0
  %v183 = vsel %vm85, %v170, 0
  %185 = vmatpush.msra.mxu0 0.0
  %186 = vmatpush.msra.mxu0 0.0
  %187 = vmatpush.msra.mxu0 0.0
  %188 = vmatpush.msra.mxu0 0.0
  %189 = vmatpush.msra.mxu0 0.0
  %190 = vmatpush.msra.mxu0 0.0
  %191 = vmatpush.msra.mxu0 0.0
  %192 = vmatpush.msra.mxu0 0.0
  %193 = vmatpush.msra.mxu0 0.0
  %194 = vmatpush.msra.mxu0 0.0
  %195 = vmatpush.msra.mxu0 0.0
  %196 = vmatpush.msra.mxu0 0.0
  %197 = vmatpush.msra.mxu0 0.0
  %198 = vmatpush.msra.mxu0 0.0
  %199 = vmatpush.msra.mxu0 0.0
  %200 = vmatpush.msra.mxu0 %v183
  %201 = vmatmul.f32.gmra.mxu0 %v172
  %v202 = vpop.f32.mrf.mxu0
  %v203 = vadd.f32 0.0, %v202
  %204 = vmatmul.f32.gmra.mxu0 %v175
  %v205 = vpop.f32.mrf.mxu0
  %v206 = vadd.f32 0.0, %v205
  %207 = vmatmul.f32.gmra.mxu0 %v178
  %v208 = vpop.f32.mrf.mxu0
  %v209 = vadd.f32 0.0, %v208
  %210 = vmatmul.f32.gmra.mxu0 %v181
  %v211 = vpop.f32.mrf.mxu0
  %v212 = vadd.f32 0.0, %v211
  %213 = vdwg.mxu0
  %v214 = vadd.f32 %v149, %v203
  %v215 = vadd.f32 %v152, %v206
  %v216 = vadd.f32 %v155, %v209
  %v217 = vadd.f32 %v158, %v212
  %v218 = vld [vmem:[%s2] sm:$0xff]
  %v219 = vld [vmem:[%s2 + $0x8] sm:$0xff]
  %v220 = vld [vmem:[%s2 + $0x10] sm:$0xff]
  %v221 = vld [vmem:[%s2 + $0x18] sm:$0xff]
  %223 = vset.pattern.permute.xlu0 0
  %224 = vperm.xlu0 %223, %v218
  %v225 = vpop.permute.xlu0 %224
  %228 = vset.pattern.permute.xlu0 0
  %229 = vperm.xlu0 %228, %v219
  %v230 = vpop.permute.xlu0 %229
  %233 = vset.pattern.permute.xlu0 0
  %234 = vperm.xlu0 %233, %v220
  %v235 = vpop.permute.xlu0 %234
  %238 = vset.pattern.permute.xlu0 0
  %239 = vperm.xlu0 %238, %v221
  %v240 = vpop.permute.xlu0 %239
  %v242 = vadd.f32 %v214, %v225
  %v243 = vadd.f32 %v215, %v230
  %v244 = vadd.f32 %v216, %v235
  %v245 = vadd.f32 %v217, %v240
  %v246 = vmax.f32 %v242, 0.0
  %v247 = vmax.f32 %v243, 0.0
  %v248 = vmax.f32 %v244, 0.0
  %v249 = vmax.f32 %v245, 0.0
  %v250 = vld [vmem:[%s3] sm:$0xff]
  %v251 = vld [vmem:[%s3 + $0x8] sm:$0xff]
  %v252 = vld [vmem:[%s3 + $0x10] sm:$0xff]
  %v253 = vld [vmem:[%s3 + $0x18] sm:$0xff]
  %v254 = vld [vmem:[%s4] sm:$0xff]
  %v255 = vld [vmem:[%s4 + $0x8] sm:$0xff]
  %v256 = vld [vmem:[%s4 + $0x10] sm:$0xff]
  %v257 = vld [vmem:[%s4 + $0x18] sm:$0xff]
  %259 = vset.pattern.permute.xlu0 0
  %260 = vperm.xlu0 %259, %v254
  %v261 = vpop.permute.xlu0 %260
  %264 = vset.pattern.permute.xlu0 0
  %265 = vperm.xlu0 %264, %v255
  %v266 = vpop.permute.xlu0 %265
  %269 = vset.pattern.permute.xlu0 0
  %270 = vperm.xlu0 %269, %v256
  %v271 = vpop.permute.xlu0 %270
  %274 = vset.pattern.permute.xlu0 0
  %275 = vperm.xlu0 %274, %v257
  %v276 = vpop.permute.xlu0 %275
  %vm278 = vcmask 261120
  %v280 = vsel %vm278, %v250, 0
  %v283 = vsel %vm278, %v251, 0
  %v286 = vsel %vm278, %v252, 0
  %v289 = vsel %vm278, %v253, 0
  %291 = vmatpush.msra.mxu0 0.0
  %292 = vmatpush.msra.mxu0 0.0
  %293 = vmatpush.msra.mxu0 0.0
  %294 = vmatpush.msra.mxu0 0.0
  %295 = vmatpush.msra.mxu0 0.0
  %296 = vmatpush.msra.mxu0 0.0
  %297 = vmatpush.msra.mxu0 0.0
  %298 = vmatpush.msra.mxu0 0.0
  %299 = vmatpush.msra.mxu0 0.0
  %300 = vmatpush.msra.mxu0 0.0
  %301 = vmatpush.msra.mxu0 0.0
  %302 = vmatpush.msra.mxu0 0.0
  %303 = vmatpush.msra.mxu0 %v249
  %304 = vmatpush.msra.mxu0 %v248
  %305 = vmatpush.msra.mxu0 %v247
  %306 = vmatpush.msra.mxu0 %v246
  %307 = vmatmul.f32.gmra.mxu0 %v280
  %v308 = vpop.f32.mrf.mxu0
  %v309 = vadd.f32 %v261, %v308
  %310 = vmatmul.f32.gmra.mxu0 %v283
  %v311 = vpop.f32.mrf.mxu0
  %v312 = vadd.f32 %v266, %v311
  %313 = vmatmul.f32.gmra.mxu0 %v286
  %v314 = vpop.f32.mrf.mxu0
  %v315 = vadd.f32 %v271, %v314
  %316 = vmatmul.f32.gmra.mxu0 %v289
  %v317 = vpop.f32.mrf.mxu0
  %v318 = vadd.f32 %v276, %v317
  %319 = vdwg.mxu0
  %v320 = vtanh.pop %v309
  %v321 = vtanh.pop %v312
  %v322 = vtanh.pop %v315
  %v323 = vtanh.pop %v318
  %v324 = vld [vmem:[%s5] sm:$0x3]
  %v325 = vld [vmem:[%s6] sm:$0x3]
  %327 = vset.pattern.permute.xlu0 0
  %328 = vperm.xlu0 %327, %v325
  %v329 = vpop.permute.xlu0 %328
  %v332 = vsel %vm278, %v324, 0
  %334 = vmatpush.msra.mxu0 0.0
  %335 = vmatpush.msra.mxu0 0.0
  %336 = vmatpush.msra.mxu0 0.0
  %337 = vmatpush.msra.mxu0 0.0
  %338 = vmatpush.msra.mxu0 0.0
  %339 = vmatpush.msra.mxu0 0.0
  %340 = vmatpush.msra.mxu0 0.0
  %341 = vmatpush.msra.mxu0 0.0
  %342 = vmatpush.msra.mxu0 0.0
  %343 = vmatpush.msra.mxu0 0.0
  %344 = vmatpush.msra.mxu0 0.0
  %345 = vmatpush.msra.mxu0 0.0
  %346 = vmatpush.msra.mxu0 %v323
  %347 = vmatpush.msra.mxu0 %v322
  %348 = vmatpush.msra.mxu0 %v321
  %349 = vmatpush.msra.mxu0 %v320
  %350 = vmatmul.f32.gmra.mxu0 %v332
  %v351 = vpop.f32.mrf.mxu0
  %v352 = vadd.f32 %v329, %v351
  %353 = vdwg.mxu0
  %354 = vst [vmem:[%s7] sm:$0x3] %v352
  // Predicated region
  $region45: #{narx_forward.1} parent=0 // pred_check
    _
  $region46: #{narx_forward.1} parent=0 // pred_check_branch
    %356 = sbr.rel (0) target = $region48
  $region47: #{narx_forward.1} parent=0 // pred_region
    _
  $region48: #{narx_forward.1} parent=0 // pred_fallthru
    _
  // Predicated region
  $region49: #{narx_forward.1} parent=0 // pred_check
    _
  $region50: #{narx_forward.1} parent=0 // pred_check_branch
    %358 = sbr.rel (0) target = $region52
  $region51: #{narx_forward.1} parent=0 // pred_region
    _
  $region52: #{narx_forward.1} parent=0 // pred_fallthru
    _
  %359 = vsyncmov [#allocation3]
  %s360 = vpop.sfrf %359
  %p361 = scmp.eq.s32.totalorder %s360, 0
  %p362 = pneg %p361
  %364 = shalt.err (%p362)

</llo_original>
